<compile_context>
chip_gen: v5e
topology: v5e:2x2
jax: 0.10.0
libtpu: 0.0.40
codegen_flags: <defaults>
</compile_context>

<pallas_src>
import math

import jax
import jax.numpy as jnp
from jax.experimental import pallas as pl
from jax.experimental.pallas import tpu as pltpu


def _mean_std_kernel(x_ref, out_ref):
    # x_ref: (row_tile, D) block; reduction runs over the lane (last) axis.
    x = x_ref[...].astype(jnp.float32)
    mean = jnp.mean(x, axis=-1, keepdims=True)                 # (row_tile, 1)
    centered = x - mean                                        # reused for the 2nd pass
    var = jnp.mean(centered * centered, axis=-1, keepdims=True)
    std = jnp.sqrt(var + 1e-5)
    # Fused (row_tile, 2) output slab: col 0 = mean, col 1 = std.  One output
    # array / one writeback DMA per grid step instead of two width-1 streams.
    out_ref[:, 0:1] = mean.astype(out_ref.dtype)
    out_ref[:, 1:2] = std.astype(out_ref.dtype)


def mean_and_std(x, *, max_rows_per_block=None,
                 vmem_block_budget_bytes=20 * 1024 * 1024):
    """Returns (mean over last axis, keepdim) and (std over last axis, no keepdim).

    std = sqrt(mean((x - mean)^2, -1) + 1e-5), matching the PyTorch reference.
    """
    orig_shape = x.shape
    d = int(orig_shape[-1])
    rows = int(math.prod(orig_shape[:-1]))
    x2 = x.reshape(rows, d)

    isz = jnp.dtype(x.dtype).itemsize
    # VMEM footprint per row of a block (lane dim is padded to 128 in VMEM):
    d_pad = pl.cdiv(d, 128) * 128
    per_row_bytes = (
        2 * d_pad * isz          # double-buffered input block
        + 3 * d_pad * 4          # f32 working copies inside the kernel
        + 2 * 128 * isz          # double-buffered (lane-padded) output block
    )
    # Largest row tile that fits the budget (sized conservatively for v7x's
    # smaller 64 MiB VMEM / 32 MiB scoped default).
    rt = max(8, (vmem_block_budget_bytes // per_row_bytes) // 8 * 8)
    # Keep >= 2 grid steps when possible so v7x can shard rows across its 2 TCs
    # (no-op on v5e/v6e).
    rt = min(rt, ((pl.cdiv(rows, 2) + 7) // 8) * 8)
    if max_rows_per_block is not None:
        rt = min(rt, max(8, (max_rows_per_block // 8) * 8))
    row_tile = max(8, rt)

    grid0 = pl.cdiv(rows, row_tile)   # no divisibility assert: boundary block is clipped

    out = pl.pallas_call(
        _mean_std_kernel,
        out_shape=jax.ShapeDtypeStruct((rows, 2), x.dtype),
        grid_spec=pltpu.PrefetchScalarGridSpec(
            num_scalar_prefetch=0,
            grid=(grid0,),
            in_specs=[pl.BlockSpec((row_tile, d), lambda i: (i, 0))],
            out_specs=pl.BlockSpec((row_tile, 2), lambda i: (i, 0)),
        ),
        compiler_params=pltpu.CompilerParams(
            dimension_semantics=("parallel",),
            vmem_limit_bytes=32 * 1024 * 1024,
        ),
        cost_estimate=pl.CostEstimate(
            flops=3 * rows * d,
            transcendentals=rows,
            bytes_accessed=rows * d * isz + rows * 2 * isz,
        ),
    )(x2)

    mean = out[:, 0].reshape(orig_shape[:-1] + (1,))   # keepdim=True, like torch
    std = out[:, 1].reshape(orig_shape[:-1])           # no keepdim, like torch
    return mean, std


if __name__ == "__main__":
    key = jax.random.PRNGKey(0)
    x = jax.random.normal(key, (2, 4, 16, 32), dtype=jnp.float32)

    mean, std = mean_and_std(x)
    jax.block_until_ready((mean, std))

    # quick correctness check against plain JAX
    ref_mean = jnp.mean(x, axis=-1, keepdims=True)
    ref_std = jnp.sqrt(jnp.mean((x - ref_mean) ** 2, axis=-1) + 1e-5)
    assert mean.shape == ref_mean.shape and std.shape == ref_std.shape
    assert jnp.allclose(mean, ref_mean, atol=1e-5, rtol=1e-5)
    assert jnp.allclose(std, ref_std, atol=1e-5, rtol=1e-5)

    print("KERNEL_OK")
</pallas_src>

<mosaic_0001>
module attributes {stable_mosaic.version = 11 : i64} {
  func.func @_mean_std_kernel(%arg0: i32, %arg1: memref<64x32xf32, #tpu.memory_space<vmem>>, %arg2: memref<64x2xf32, #tpu.memory_space<vmem>>) attributes {dimension_semantics = [#tpu.dimension_semantics<parallel>], iteration_bounds = array<i64: 2>, scalar_prefetch = 0 : i64, scratch_operands = 0 : i64, tpu.core_type = #tpu.core_type<tc>, window_params = [{transform_indices = @transform_0, window_bounds = array<i64: 64, 32>}, {transform_indices = @transform_1, window_bounds = array<i64: 64, 2>}]} {
    %c0 = arith.constant 0 : index
    %c0_0 = arith.constant 0 : index
    %0 = vector.load %arg1[%c0, %c0_0] : memref<64x32xf32, #tpu.memory_space<vmem>>, vector<64x32xf32>
    %cst = arith.constant dense<0.000000e+00> : vector<64xf32>
    %1 = vector.multi_reduction <add>, %0, %cst [1] : vector<64x32xf32> to vector<64xf32>
    %2 = vector.shape_cast %1 : vector<64xf32> to vector<64x1xf32>
    %cst_1 = arith.constant 3.200000e+01 : f32
    %3 = vector.broadcast %cst_1 : f32 to vector<64x1xf32>
    %4 = arith.divf %2, %3 : vector<64x1xf32>
    %5 = vector.broadcast %4 : vector<64x1xf32> to vector<64x32xf32>
    %6 = arith.subf %0, %5 : vector<64x32xf32>
    %7 = arith.mulf %6, %6 : vector<64x32xf32>
    %cst_2 = arith.constant dense<0.000000e+00> : vector<64xf32>
    %8 = vector.multi_reduction <add>, %7, %cst_2 [1] : vector<64x32xf32> to vector<64xf32>
    %9 = vector.shape_cast %8 : vector<64xf32> to vector<64x1xf32>
    %cst_3 = arith.constant 3.200000e+01 : f32
    %10 = vector.broadcast %cst_3 : f32 to vector<64x1xf32>
    %11 = arith.divf %9, %10 : vector<64x1xf32>
    %cst_4 = arith.constant 9.99999974E-6 : f32
    %12 = vector.broadcast %cst_4 : f32 to vector<64x1xf32>
    %13 = arith.addf %11, %12 : vector<64x1xf32>
    %14 = math.sqrt %13 : vector<64x1xf32>
    %c0_5 = arith.constant 0 : index
    %c0_6 = arith.constant 0 : index
    %15 = vector.load %arg2[%c0_5, %c0_6] : memref<64x2xf32, #tpu.memory_space<vmem>>, vector<64x1xf32>
    tpu.vector_store %arg2[%c0_5, %c0_6], %4 {strides = array<i32>} : memref<64x2xf32, #tpu.memory_space<vmem>>, vector<64x1xf32>,
    %c0_7 = arith.constant 0 : index
    %c1 = arith.constant 1 : index
    %16 = vector.load %arg2[%c0_7, %c1] : memref<64x2xf32, #tpu.memory_space<vmem>>, vector<64x1xf32>
    tpu.vector_store %arg2[%c0_7, %c1], %14 {strides = array<i32>} : memref<64x2xf32, #tpu.memory_space<vmem>>, vector<64x1xf32>,
    return
  }
  func.func @transform_0(%arg0: i32) -> (i32, i32) {
    %c0_i32 = arith.constant 0 : i32
    %c0_i32_0 = arith.constant 0 : i32
    return %arg0, %c0_i32 : i32, i32
  }
  func.func @transform_1(%arg0: i32) -> (i32, i32) {
    %c0_i32 = arith.constant 0 : i32
    %c0_i32_0 = arith.constant 0 : i32
    return %arg0, %c0_i32 : i32, i32
  }
}

</mosaic_0001>

<llo_original>
// kernel: tpu_custom_call.1
$region0: #{tpu_custom_call.1}
  #allocation0 [shape = 'u32[]', space=smem, size = 0x4, offset = 0x4, fixed_abs, tag = 'smem constant byte address 0x4 - core index']
  #allocation1 [shape = 'u32[72,128]{1,0:T(1,128)}', space=vmem, size = 0x9000, scoped, tag = 'internal scratch']
  %s0 = inlined_call_operand.vmem [shape: f32[128,32], index: 0, kind: input, shape index: {}]
  %s1 = inlined_call_operand.vmem [shape: f32[128,2], index: 1, kind: output, shape index: {}]
  %s2 = sld [smem:[#allocation0]]
  $region37: #{tpu_custom_call.1} parent=0
    _
  %s4 = ssub.s32 1, %s2
  %s5 = scalar_select 0, %s4, %s2
  loop: start=0, step=1, limit=4
  $region2: #{tpu_custom_call.1} parent=0 // loop_pre_header
    _
  $region3: #{tpu_custom_call.1} parent=0 // loop_header
    %s7 = sphi 0, %s11
    %p8 = scmp.ge.s32.totalorder %s7, 4
    %s17 = sphi 0, %s19
    %s20 = sphi 0, %s17
    %s21 = sphi 0, %s20
    %s37 = sphi 0, %s21
    %s43 = sphi 0, %s45
    %s46 = sphi 0, %s43
    %s47 = sphi 0, %s46
    %s63 = sphi 0, %s47
  $region4: #{tpu_custom_call.1} parent=0 // loop_header_branch
    %10 = sbr.rel (%p8) target = $region8
  $region5: #{tpu_custom_call.1} parent=0 // loop_body
    %s12 = ssub.s32 %s7, 1
    %s13 = ssub.s32 %s7, 2
    %s14 = sadd.s32 %s7, 1
    %s15 = ssub.s32 %s7, %s14
    %p16 = scmp.eq.s32.totalorder %s15, 0
    %s18 = sadd.s32 %s17, 1
    %s19 = scalar_select %p16, %s17, %s18
    %p22 = pneg %p16
    %p23 = scmp.eq.s32.totalorder %s7, 1
    %p24 = por %p22, %p23
    %p25 = scmp.ne.s32.totalorder %s17, %s20
    %p26 = scmp.eq.s32.totalorder %s7, 0
    %p27 = por %p25, %p26
    %p28 = scmp.ne.s32.totalorder %s17, %s20
    %p29 = scmp.eq.s32.totalorder %s12, 1
    %p30 = por %p28, %p29
    %p31 = scmp.ne.s32.totalorder %s20, %s21
    %p32 = scmp.eq.s32.totalorder %s12, 0
    %p33 = por %p31, %p32
    %p34 = scmp.ne.s32.totalorder %s20, %s21
    %p35 = scmp.eq.s32.totalorder %s13, 1
    %p36 = por %p34, %p35
    %p38 = scmp.ne.s32.totalorder %s21, %s37
    %p39 = scmp.eq.s32.totalorder %s13, 0
    %p40 = por %p38, %p39
    %s41 = ssub.s32 %s7, %s14
    %p42 = scmp.eq.s32.totalorder %s41, 0
    %s44 = sadd.s32 %s43, 1
    %s45 = scalar_select %p42, %s43, %s44
    %p48 = pneg %p42
    %p49 = scmp.eq.s32.totalorder %s7, 1
    %p50 = por %p48, %p49
    %p51 = scmp.ne.s32.totalorder %s43, %s46
    %p52 = scmp.eq.s32.totalorder %s7, 0
    %p53 = por %p51, %p52
    %p54 = scmp.ne.s32.totalorder %s43, %s46
    %p55 = scmp.eq.s32.totalorder %s12, 1
    %p56 = por %p54, %p55
    %p57 = scmp.ne.s32.totalorder %s46, %s47
    %p58 = scmp.eq.s32.totalorder %s12, 0
    %p59 = por %p57, %p58
    %p60 = scmp.ne.s32.totalorder %s46, %s47
    %p61 = scmp.eq.s32.totalorder %s13, 1
    %p62 = por %p60, %p61
    %p64 = scmp.ne.s32.totalorder %s47, %s63
    %p65 = scmp.eq.s32.totalorder %s13, 0
    %p66 = por %p64, %p65
    %p67 = scmp.le.s32.totalorder 1, %s7
    %p68 = scmp.lt.s32.totalorder %s7, 3
    %p69 = pnand %p67, %p68
    %p70 = pneg %p69
    // Predicated region
    $region9: #{tpu_custom_call.1} parent=5 // pred_check
      _
    $region10: #{tpu_custom_call.1} parent=5 // pred_check_branch
      %72 = sbr.rel (%p69) target = $region12
    $region11: #{tpu_custom_call.1} parent=5 // pred_region
      %s73 = ssub.s32 %s7, 1
    $region12: #{tpu_custom_call.1} parent=5 // pred_fallthru
      _
    %p74 = scmp.lt.s32.totalorder %s7, 2
    // Predicated region
    $region13: #{tpu_custom_call.1} parent=5 // pred_check
      %p75 = pneg %p74
    $region14: #{tpu_custom_call.1} parent=5 // pred_check_branch
      %77 = sbr.rel (%p75) target = $region16
    $region15: #{tpu_custom_call.1} parent=5 // pred_region
      // Predicated region
      $region17: #{tpu_custom_call.1} parent=15 // pred_check
        %p78 = pneg %p27
      $region18: #{tpu_custom_call.1} parent=15 // pred_check_branch
        %80 = sbr.rel (%p78) target = $region20
      $region19: #{tpu_custom_call.1} parent=15 // pred_region
        %s81 = smul.u32 8, %s7
        %p82 = scmp.lt.s32.totalorder %s81, 15
        %s83 = scalar_select %p82, %s81, 15
        %s84 = smul.addr %s83, 8
        %s85 = scalar_lea.vmem %s0, %s84
        %s86 = smul.u32 8, %s7
      $region20: #{tpu_custom_call.1} parent=15 // pred_fallthru
        _
    $region16: #{tpu_custom_call.1} parent=5 // pred_fallthru
      _
    %p87 = scmp.le.s32.totalorder 1, %s7
    %p88 = scmp.lt.s32.totalorder %s7, 3
    %p89 = pnand %p87, %p88
    %p90 = pneg %p89
    // Predicated region
    $region21: #{tpu_custom_call.1} parent=5 // pred_check
      _
    $region22: #{tpu_custom_call.1} parent=5 // pred_check_branch
      %92 = sbr.rel (%p89) target = $region24
    $region23: #{tpu_custom_call.1} parent=5 // pred_region
      %s93 = ssub.s32 %s7, 1
      %s94 = smul.u32 8, %s12
      %p95 = scmp.lt.s32.totalorder %s94, 15
      %s96 = scalar_select %p95, %s94, 15
      %s97 = smul.addr %s96, 8
      %s98 = scalar_lea.vmem %s0, %s97
      %p99 = pneg %p33
      %p100 = pneg %p30
      %p101 = pneg %p59
      %p102 = pneg %p56
      %s103 = smul.u32 8, %s12
      %p104 = scmp.lt.s32.totalorder %s103, 15
      %s105 = scalar_select %p104, %s103, 15
      %s106 = smul.addr %s105, 8
      %s107 = scalar_lea.vmem %s1, %s106
      %s108 = smul.u32 8, %s12
      %p109 = scmp.lt.s32.totalorder %s108, 15
      %s110 = scalar_select %p109, %s108, 15
      %s111 = smul.addr %s110, 8
      %s112 = scalar_lea.vmem %s0, %s111
      %s113 = smul.u32 8, %s12
      %s114 = smul.u32 8, %s12
      %p115 = scmp.lt.s32.totalorder %s114, 15
      %s116 = scalar_select %p115, %s114, 15
      %s117 = smul.addr %s116, 8
      %s118 = scalar_lea.vmem %s1, %s117
      %s119 = smul.u32 8, %s12
      %v120 = vld [vmem:[%s112] sm:$0xff]
      %v121 = vld [vmem:[%s112 + $0x8] sm:$0xff]
      %v122 = vld [vmem:[%s112 + $0x10] sm:$0xff]
      %v123 = vld [vmem:[%s112 + $0x18] sm:$0xff]
      %v124 = vld [vmem:[%s112 + $0x20] sm:$0xff]
      %v125 = vld [vmem:[%s112 + $0x28] sm:$0xff]
      %v126 = vld [vmem:[%s112 + $0x30] sm:$0xff]
      %v127 = vld [vmem:[%s112 + $0x38] sm:$0xff]
      %vm128 = vcmask 261120
      %v129 = vsel %vm128, %v120, 0.0
      %130 = vadd.xlane.f32.xlu0 %v129
      %v131 = vpop.xlane.xlu0 %130
      %v132 = vsel %vm128, %v121, 0.0
      %133 = vadd.xlane.f32.xlu0 %v132
      %v134 = vpop.xlane.xlu0 %133
      %v135 = vsel %vm128, %v122, 0.0
      %136 = vadd.xlane.f32.xlu0 %v135
      %v137 = vpop.xlane.xlu0 %136
      %v138 = vsel %vm128, %v123, 0.0
      %139 = vadd.xlane.f32.xlu0 %v138
      %v140 = vpop.xlane.xlu0 %139
      %v141 = vsel %vm128, %v124, 0.0
      %142 = vadd.xlane.f32.xlu0 %v141
      %v143 = vpop.xlane.xlu0 %142
      %v144 = vsel %vm128, %v125, 0.0
      %145 = vadd.xlane.f32.xlu0 %v144
      %v146 = vpop.xlane.xlu0 %145
      %v147 = vsel %vm128, %v126, 0.0
      %148 = vadd.xlane.f32.xlu0 %v147
      %v149 = vpop.xlane.xlu0 %148
      %v150 = vsel %vm128, %v127, 0.0
      %151 = vadd.xlane.f32.xlu0 %v150
      %v152 = vpop.xlane.xlu0 %151
      %v153 = vrcp.pop 32.0
      %v154 = vmul.f32 32.0, %v153
      %v155 = vsub.f32 1.0, %v154
      %v156 = vmul.f32 %v153, %v155
      %v157 = vadd.f32 %v153, %v156
      %vm158 = vweird.f32 %v153
      %v159 = vsel %vm158, %v153, %v157
      %v160 = vmul.f32 %v131, %v159
      %v161 = vmul.f32 %v134, %v159
      %v162 = vmul.f32 %v137, %v159
      %v163 = vmul.f32 %v140, %v159
      %v164 = vmul.f32 %v143, %v159
      %v165 = vmul.f32 %v146, %v159
      %v166 = vmul.f32 %v149, %v159
      %v167 = vmul.f32 %v152, %v159
      %v168 = vsub.f32 %v120, %v160
      %v169 = vsub.f32 %v121, %v161
      %v170 = vsub.f32 %v122, %v162
      %v171 = vsub.f32 %v123, %v163
      %v172 = vsub.f32 %v124, %v164
      %v173 = vsub.f32 %v125, %v165
      %v174 = vsub.f32 %v126, %v166
      %v175 = vsub.f32 %v127, %v167
      %v176 = vmul.f32 %v168, %v168
      %v177 = vmul.f32 %v169, %v169
      %v178 = vmul.f32 %v170, %v170
      %v179 = vmul.f32 %v171, %v171
      %v180 = vmul.f32 %v172, %v172
      %v181 = vmul.f32 %v173, %v173
      %v182 = vmul.f32 %v174, %v174
      %v183 = vmul.f32 %v175, %v175
      %v184 = vsel %vm128, %v176, 0.0
      %185 = vadd.xlane.f32.xlu0 %v184
      %v186 = vpop.xlane.xlu0 %185
      %v187 = vsel %vm128, %v177, 0.0
      %188 = vadd.xlane.f32.xlu0 %v187
      %v189 = vpop.xlane.xlu0 %188
      %v190 = vsel %vm128, %v178, 0.0
      %191 = vadd.xlane.f32.xlu0 %v190
      %v192 = vpop.xlane.xlu0 %191
      %v193 = vsel %vm128, %v179, 0.0
      %194 = vadd.xlane.f32.xlu0 %v193
      %v195 = vpop.xlane.xlu0 %194
      %v196 = vsel %vm128, %v180, 0.0
      %197 = vadd.xlane.f32.xlu0 %v196
      %v198 = vpop.xlane.xlu0 %197
      %v199 = vsel %vm128, %v181, 0.0
      %200 = vadd.xlane.f32.xlu0 %v199
      %v201 = vpop.xlane.xlu0 %200
      %v202 = vsel %vm128, %v182, 0.0
      %203 = vadd.xlane.f32.xlu0 %v202
      %v204 = vpop.xlane.xlu0 %203
      %v205 = vsel %vm128, %v183, 0.0
      %206 = vadd.xlane.f32.xlu0 %v205
      %v207 = vpop.xlane.xlu0 %206
      %v208 = vmul.f32 %v186, %v159
      %v209 = vmul.f32 %v189, %v159
      %v210 = vmul.f32 %v192, %v159
      %v211 = vmul.f32 %v195, %v159
      %v212 = vmul.f32 %v198, %v159
      %v213 = vmul.f32 %v201, %v159
      %v214 = vmul.f32 %v204, %v159
      %v215 = vmul.f32 %v207, %v159
      %v216 = vadd.f32 %v208, 1e-05
      %v217 = vadd.f32 %v209, 1e-05
      %v218 = vadd.f32 %v210, 1e-05
      %v219 = vadd.f32 %v211, 1e-05
      %v220 = vadd.f32 %v212, 1e-05
      %v221 = vadd.f32 %v213, 1e-05
      %v222 = vadd.f32 %v214, 1e-05
      %v223 = vadd.f32 %v215, 1e-05
      %v224 = vrsqrt.pop %v216
      %v225 = vmul.f32 %v224, %v216
      %v226 = vmul.f32 %v225, %v224
      %v227 = vmul.f32 0.5, %v226
      %v228 = vsub.f32 1.5, %v227
      %v229 = vmul.f32 %v224, %v228
      %v230 = vmul.f32 %v216, %v229
      %vm231 = vcmp.eq.f32.partialorder %v216, inf
      %v232 = vsel %vm231, %v216, %v230
      %vm233 = vcmp.eq.f32.partialorder %v216, 0.0
      %v234 = vand.u32 %v216, 2147483648
      %v235 = vsel %vm233, %v234, %v232
      %v236 = vrsqrt.pop %v217
      %v237 = vmul.f32 %v236, %v217
      %v238 = vmul.f32 %v237, %v236
      %v239 = vmul.f32 0.5, %v238
      %v240 = vsub.f32 1.5, %v239
      %v241 = vmul.f32 %v236, %v240
      %v242 = vmul.f32 %v217, %v241
      %vm243 = vcmp.eq.f32.partialorder %v217, inf
      %v244 = vsel %vm243, %v217, %v242
      %vm245 = vcmp.eq.f32.partialorder %v217, 0.0
      %v246 = vand.u32 %v217, 2147483648
      %v247 = vsel %vm245, %v246, %v244
      %v248 = vrsqrt.pop %v218
      %v249 = vmul.f32 %v248, %v218
      %v250 = vmul.f32 %v249, %v248
      %v251 = vmul.f32 0.5, %v250
      %v252 = vsub.f32 1.5, %v251
      %v253 = vmul.f32 %v248, %v252
      %v254 = vmul.f32 %v218, %v253
      %vm255 = vcmp.eq.f32.partialorder %v218, inf
      %v256 = vsel %vm255, %v218, %v254
      %vm257 = vcmp.eq.f32.partialorder %v218, 0.0
      %v258 = vand.u32 %v218, 2147483648
      %v259 = vsel %vm257, %v258, %v256
      %v260 = vrsqrt.pop %v219
      %v261 = vmul.f32 %v260, %v219
      %v262 = vmul.f32 %v261, %v260
      %v263 = vmul.f32 0.5, %v262
      %v264 = vsub.f32 1.5, %v263
      %v265 = vmul.f32 %v260, %v264
      %v266 = vmul.f32 %v219, %v265
      %vm267 = vcmp.eq.f32.partialorder %v219, inf
      %v268 = vsel %vm267, %v219, %v266
      %vm269 = vcmp.eq.f32.partialorder %v219, 0.0
      %v270 = vand.u32 %v219, 2147483648
      %v271 = vsel %vm269, %v270, %v268
      %v272 = vrsqrt.pop %v220
      %v273 = vmul.f32 %v272, %v220
      %v274 = vmul.f32 %v273, %v272
      %v275 = vmul.f32 0.5, %v274
      %v276 = vsub.f32 1.5, %v275
      %v277 = vmul.f32 %v272, %v276
      %v278 = vmul.f32 %v220, %v277
      %vm279 = vcmp.eq.f32.partialorder %v220, inf
      %v280 = vsel %vm279, %v220, %v278
      %vm281 = vcmp.eq.f32.partialorder %v220, 0.0
      %v282 = vand.u32 %v220, 2147483648
      %v283 = vsel %vm281, %v282, %v280
      %v284 = vrsqrt.pop %v221
      %v285 = vmul.f32 %v284, %v221
      %v286 = vmul.f32 %v285, %v284
      %v287 = vmul.f32 0.5, %v286
      %v288 = vsub.f32 1.5, %v287
      %v289 = vmul.f32 %v284, %v288
      %v290 = vmul.f32 %v221, %v289
      %vm291 = vcmp.eq.f32.partialorder %v221, inf
      %v292 = vsel %vm291, %v221, %v290
      %vm293 = vcmp.eq.f32.partialorder %v221, 0.0
      %v294 = vand.u32 %v221, 2147483648
      %v295 = vsel %vm293, %v294, %v292
      %v296 = vrsqrt.pop %v222
      %v297 = vmul.f32 %v296, %v222
      %v298 = vmul.f32 %v297, %v296
      %v299 = vmul.f32 0.5, %v298
      %v300 = vsub.f32 1.5, %v299
      %v301 = vmul.f32 %v296, %v300
      %v302 = vmul.f32 %v222, %v301
      %vm303 = vcmp.eq.f32.partialorder %v222, inf
      %v304 = vsel %vm303, %v222, %v302
      %vm305 = vcmp.eq.f32.partialorder %v222, 0.0
      %v306 = vand.u32 %v222, 2147483648
      %v307 = vsel %vm305, %v306, %v304
      %v308 = vrsqrt.pop %v223
      %v309 = vmul.f32 %v308, %v223
      %v310 = vmul.f32 %v309, %v308
      %v311 = vmul.f32 0.5, %v310
      %v312 = vsub.f32 1.5, %v311
      %v313 = vmul.f32 %v308, %v312
      %v314 = vmul.f32 %v223, %v313
      %vm315 = vcmp.eq.f32.partialorder %v223, inf
      %v316 = vsel %vm315, %v223, %v314
      %vm317 = vcmp.eq.f32.partialorder %v223, 0.0
      %v318 = vand.u32 %v223, 2147483648
      %v319 = vsel %vm317, %v318, %v316
      %vm320 = vcmask 7168
      %321 = vst.msk [vmem:[%s118] sm:$0xff] %vm320, %v160
      %322 = vst.msk [vmem:[%s118 + $0x8] sm:$0xff] %vm320, %v161
      %323 = vst.msk [vmem:[%s118 + $0x10] sm:$0xff] %vm320, %v162
      %324 = vst.msk [vmem:[%s118 + $0x18] sm:$0xff] %vm320, %v163
      %325 = vst.msk [vmem:[%s118 + $0x20] sm:$0xff] %vm320, %v164
      %326 = vst.msk [vmem:[%s118 + $0x28] sm:$0xff] %vm320, %v165
      %327 = vst.msk [vmem:[%s118 + $0x30] sm:$0xff] %vm320, %v166
      %328 = vst.msk [vmem:[%s118 + $0x38] sm:$0xff] %vm320, %v167
      %vm329 = vcmask 15368
      %330 = vst.msk [vmem:[%s118] sm:$0xff] %vm329, %v235
      %331 = vst.msk [vmem:[%s118 + $0x8] sm:$0xff] %vm329, %v247
      %332 = vst.msk [vmem:[%s118 + $0x10] sm:$0xff] %vm329, %v259
      %333 = vst.msk [vmem:[%s118 + $0x18] sm:$0xff] %vm329, %v271
      %334 = vst.msk [vmem:[%s118 + $0x20] sm:$0xff] %vm329, %v283
      %335 = vst.msk [vmem:[%s118 + $0x28] sm:$0xff] %vm329, %v295
      %336 = vst.msk [vmem:[%s118 + $0x30] sm:$0xff] %vm329, %v307
      %337 = vst.msk [vmem:[%s118 + $0x38] sm:$0xff] %vm329, %v319
      %s338 = smul.u32 8, %s12
      %p339 = scmp.lt.s32.totalorder %s338, 15
      %s340 = scalar_select %p339, %s338, 15
      %s341 = smul.addr %s340, 8
      %s342 = scalar_lea.vmem %s1, %s341
      // Predicated region
      $region25: #{tpu_custom_call.1} parent=23 // pred_check
        %p343 = pneg %p56
      $region26: #{tpu_custom_call.1} parent=23 // pred_check_branch
        %345 = sbr.rel (%p343) target = $region28
      $region27: #{tpu_custom_call.1} parent=23 // pred_region
        %s346 = smul.u32 8, %s12
      $region28: #{tpu_custom_call.1} parent=23 // pred_fallthru
        _
    $region24: #{tpu_custom_call.1} parent=5 // pred_fallthru
      _
    %p347 = scmp.le.s32.totalorder 2, %s7
    // Predicated region
    $region29: #{tpu_custom_call.1} parent=5 // pred_check
      %p348 = pneg %p347
    $region30: #{tpu_custom_call.1} parent=5 // pred_check_branch
      %350 = sbr.rel (%p348) target = $region32
    $region31: #{tpu_custom_call.1} parent=5 // pred_region
      %s351 = ssub.s32 %s7, 2
      // Predicated region
      $region33: #{tpu_custom_call.1} parent=31 // pred_check
        %p352 = pneg %p62
      $region34: #{tpu_custom_call.1} parent=31 // pred_check_branch
        %354 = sbr.rel (%p352) target = $region36
      $region35: #{tpu_custom_call.1} parent=31 // pred_region
        %s355 = smul.u32 8, %s13
        %p356 = scmp.lt.s32.totalorder %s355, 15
        %s357 = scalar_select %p356, %s355, 15
        %s358 = smul.addr %s357, 8
        %s359 = scalar_lea.vmem %s1, %s358
      $region36: #{tpu_custom_call.1} parent=31 // pred_fallthru
        _
    $region32: #{tpu_custom_call.1} parent=5 // pred_fallthru
      _
  $region6: #{tpu_custom_call.1} parent=0 // loop_footer
    %s11 = sadd.s32 1, %s7
  $region7: #{tpu_custom_call.1} parent=0 // loop_footer_branch
    %6 = sbr.rel target = $region3
  $region8: #{tpu_custom_call.1} parent=0 // loop_exit
    _

</llo_original>
